<compile_context>
chip_gen: v7x
topology: tpu7x:2x2x1
jax: 0.10.0
libtpu: 0.0.40
codegen_flags: <defaults>
</compile_context>

<pallas_src>
import functools

import jax
import jax.numpy as jnp
from jax.experimental import pallas as pl
from jax.experimental.pallas import tpu as pltpu


def _round_up(x, m):
    return ((x + m - 1) // m) * m


def mlp_kernel(x_ref, w1_ref, b1_ref, w2_ref, b2_ref, w3_ref, b3_ref, o_ref):
    # fc1 + ReLU (f32 accumulation on the MXU)
    h1 = jnp.dot(x_ref[...], w1_ref[...], preferred_element_type=jnp.float32)
    h1 = jnp.maximum(h1 + b1_ref[...], 0.0)
    # fc2 + ReLU
    h2 = jnp.dot(h1, w2_ref[...], preferred_element_type=jnp.float32)
    h2 = jnp.maximum(h2 + b2_ref[...], 0.0)
    # fc3 (no activation); narrow (out_size) store, masked vst is fine here.
    out = jnp.dot(h2, w3_ref[...], preferred_element_type=jnp.float32)
    o_ref[...] = out + b3_ref[...]


@functools.partial(jax.jit, static_argnames=("tb",))
def imitation_net_forward(x, params, *, tb=4096):
    """x: (B, input_size) f32; params: dict of w1,b1,w2,b2,w3,b3.

    tb: batch-tile rows (multiple of 8 after clamping).  Default 4096 keeps the
    double-buffered footprint well under 32 MiB VMEM on all generations.  For
    very large B on v7x prefer tb such that cdiv(B, tb) >= 2 so the 'parallel'
    batch axis shards across both TensorCores.
    """
    w1, b1 = params["w1"], params["b1"]
    w2, b2 = params["w2"], params["b2"]
    w3, b3 = params["w3"], params["b3"]

    B, in_size = x.shape
    hidden = w1.shape[1]
    out_size = w3.shape[1]

    # Batch tile: multiple of 8, no larger than needed.  No padding of x —
    # Pallas masks the trailing partial block (reads unused, writes dropped).
    TB = max(8, min(_round_up(tb, 8), _round_up(B, 8)))
    grid = (pl.cdiv(B, TB),)

    # Weights/biases: full-array blocks, constant index_map -> VMEM-resident
    # (DMA'd once, reused across all batch tiles).
    def resident(a):
        nd = a.ndim
        return pl.BlockSpec(a.shape, lambda i, _nd=nd: (0,) * _nd)

    flops = 2 * B * (in_size * hidden + hidden * hidden + hidden * out_size)
    bytes_accessed = 4 * (
        x.size + w1.size + w2.size + w3.size
        + b1.size + b2.size + b3.size
        + B * out_size
    )

    return pl.pallas_call(
        mlp_kernel,
        out_shape=jax.ShapeDtypeStruct((B, out_size), jnp.float32),
        grid=grid,
        in_specs=[
            pl.BlockSpec((TB, in_size), lambda i: (i, 0)),   # x: batch-tiled
            resident(w1), resident(b1),
            resident(w2), resident(b2),
            resident(w3), resident(b3),
        ],
        out_specs=pl.BlockSpec((TB, out_size), lambda i: (i, 0)),
        compiler_params=pltpu.CompilerParams(
            dimension_semantics=("parallel",),
            vmem_limit_bytes=32 * 1024 * 1024,
        ),
        cost_estimate=pl.CostEstimate(
            flops=flops, transcendentals=0, bytes_accessed=bytes_accessed),
    )(x, w1, b1, w2, b2, w3, b3)


def init_params(key, input_size=4, hidden_size=64, output_size=2):
    """Deterministic init mimicking nn.Linear's uniform(-1/sqrt(fan_in), ...)."""
    ks = jax.random.split(key, 6)

    def linear(kw, kb, fan_in, fan_out):
        bound = 1.0 / jnp.sqrt(jnp.float32(fan_in))
        w = jax.random.uniform(kw, (fan_in, fan_out), jnp.float32, -bound, bound)
        b = jax.random.uniform(kb, (1, fan_out), jnp.float32, -bound, bound)
        return w, b

    w1, b1 = linear(ks[0], ks[1], input_size, hidden_size)
    w2, b2 = linear(ks[2], ks[3], hidden_size, hidden_size)
    w3, b3 = linear(ks[4], ks[5], hidden_size, output_size)
    return {"w1": w1, "b1": b1, "w2": w2, "b2": b2, "w3": w3, "b3": b3}


def reference_forward(x, p):
    h1 = jnp.maximum(x @ p["w1"] + p["b1"], 0.0)
    h2 = jnp.maximum(h1 @ p["w2"] + p["b2"], 0.0)
    return h2 @ p["w3"] + p["b3"]


if __name__ == "__main__":
    key = jax.random.PRNGKey(0)
    kx1, kx2, kp = jax.random.split(key, 3)

    input_size, hidden_size, output_size = 4, 64, 2
    params = init_params(kp, input_size, hidden_size, output_size)

    # Ragged small batch (single partial block, exercises OOB-row masking).
    x_small = jax.random.normal(kx1, (7, input_size), jnp.float32)
    out_small = jax.block_until_ready(imitation_net_forward(x_small, params))
    ref_small = reference_forward(x_small, params)
    assert out_small.shape == (7, output_size)
    assert jnp.allclose(out_small, ref_small, atol=1e-5, rtol=1e-5)

    # One trajectory's worth of states (100 rows); force a small tile so the
    # batch grid has multiple pipelined steps plus a ragged trailing block.
    x_traj = jax.random.normal(kx2, (100, input_size), jnp.float32)
    out_traj = jax.block_until_ready(
        imitation_net_forward(x_traj, params, tb=32))
    ref_traj = reference_forward(x_traj, params)
    assert out_traj.shape == (100, output_size)
    assert jnp.allclose(out_traj, ref_traj, atol=1e-5, rtol=1e-5)

    # Default large-tile path (single grid step for this batch size).
    out_default = jax.block_until_ready(imitation_net_forward(x_traj, params))
    assert out_default.shape == (100, output_size)
    assert jnp.allclose(out_default, ref_traj, atol=1e-5, rtol=1e-5)

    print("KERNEL_OK")
</pallas_src>

<mosaic_0001>
module attributes {stable_mosaic.version = 11 : i64} {
  func.func @mlp_kernel(%arg0: i32, %arg1: memref<8x4xf32, #tpu.memory_space<vmem>>, %arg2: memref<4x64xf32, #tpu.memory_space<vmem>>, %arg3: memref<1x64xf32, #tpu.memory_space<vmem>>, %arg4: memref<64x64xf32, #tpu.memory_space<vmem>>, %arg5: memref<1x64xf32, #tpu.memory_space<vmem>>, %arg6: memref<64x2xf32, #tpu.memory_space<vmem>>, %arg7: memref<1x2xf32, #tpu.memory_space<vmem>>, %arg8: memref<8x2xf32, #tpu.memory_space<vmem>>) attributes {dimension_semantics = [#tpu.dimension_semantics<parallel>], iteration_bounds = array<i64: 1>, scalar_prefetch = 0 : i64, scratch_operands = 0 : i64, tpu.core_type = #tpu.core_type<tc>, window_params = [{transform_indices = @transform_0, window_bounds = array<i64: 8, 4>}, {pipeline_mode = #tpu.pipeline_mode<synchronous>, transform_indices = @transform_1, window_bounds = array<i64: 4, 64>}, {pipeline_mode = #tpu.pipeline_mode<synchronous>, transform_indices = @transform_2, window_bounds = array<i64: 1, 64>}, {pipeline_mode = #tpu.pipeline_mode<synchronous>, transform_indices = @transform_3, window_bounds = array<i64: 64, 64>}, {pipeline_mode = #tpu.pipeline_mode<synchronous>, transform_indices = @transform_4, window_bounds = array<i64: 1, 64>}, {pipeline_mode = #tpu.pipeline_mode<synchronous>, transform_indices = @transform_5, window_bounds = array<i64: 64, 2>}, {pipeline_mode = #tpu.pipeline_mode<synchronous>, transform_indices = @transform_6, window_bounds = array<i64: 1, 2>}, {transform_indices = @transform_7, window_bounds = array<i64: 8, 2>}]} {
    %c0 = arith.constant 0 : index
    %c0_0 = arith.constant 0 : index
    %0 = vector.load %arg1[%c0, %c0_0] : memref<8x4xf32, #tpu.memory_space<vmem>>, vector<8x4xf32>
    %c0_1 = arith.constant 0 : index
    %c0_2 = arith.constant 0 : index
    %1 = vector.load %arg2[%c0_1, %c0_2] : memref<4x64xf32, #tpu.memory_space<vmem>>, vector<4x64xf32>
    %cst = arith.constant dense<0.000000e+00> : vector<8x64xf32>
    %2 = tpu.matmul %0, %1, %cst {dimension_numbers = #tpu.dot_dimension_numbers<[1], [0], [0], [1], [0, 0, 1, 1], [], []>} : vector<8x4xf32>, vector<4x64xf32>, vector<8x64xf32> -> vector<8x64xf32>
    %c0_3 = arith.constant 0 : index
    %c0_4 = arith.constant 0 : index
    %3 = vector.load %arg3[%c0_3, %c0_4] : memref<1x64xf32, #tpu.memory_space<vmem>>, vector<1x64xf32>
    %4 = vector.broadcast %3 : vector<1x64xf32> to vector<8x64xf32>
    %5 = arith.addf %2, %4 : vector<8x64xf32>
    %cst_5 = arith.constant 0.000000e+00 : f32
    %6 = vector.broadcast %cst_5 : f32 to vector<8x64xf32>
    %7 = arith.maximumf %5, %6 : vector<8x64xf32>
    %c0_6 = arith.constant 0 : index
    %c0_7 = arith.constant 0 : index
    %8 = vector.load %arg4[%c0_6, %c0_7] : memref<64x64xf32, #tpu.memory_space<vmem>>, vector<64x64xf32>
    %cst_8 = arith.constant dense<0.000000e+00> : vector<8x64xf32>
    %9 = tpu.matmul %7, %8, %cst_8 {dimension_numbers = #tpu.dot_dimension_numbers<[1], [0], [0], [1], [0, 0, 1, 1], [], []>} : vector<8x64xf32>, vector<64x64xf32>, vector<8x64xf32> -> vector<8x64xf32>
    %c0_9 = arith.constant 0 : index
    %c0_10 = arith.constant 0 : index
    %10 = vector.load %arg5[%c0_9, %c0_10] : memref<1x64xf32, #tpu.memory_space<vmem>>, vector<1x64xf32>
    %11 = vector.broadcast %10 : vector<1x64xf32> to vector<8x64xf32>
    %12 = arith.addf %9, %11 : vector<8x64xf32>
    %cst_11 = arith.constant 0.000000e+00 : f32
    %13 = vector.broadcast %cst_11 : f32 to vector<8x64xf32>
    %14 = arith.maximumf %12, %13 : vector<8x64xf32>
    %c0_12 = arith.constant 0 : index
    %c0_13 = arith.constant 0 : index
    %15 = vector.load %arg6[%c0_12, %c0_13] : memref<64x2xf32, #tpu.memory_space<vmem>>, vector<64x2xf32>
    %cst_14 = arith.constant dense<0.000000e+00> : vector<8x2xf32>
    %16 = tpu.matmul %14, %15, %cst_14 {dimension_numbers = #tpu.dot_dimension_numbers<[1], [0], [0], [1], [0, 0, 1, 1], [], []>} : vector<8x64xf32>, vector<64x2xf32>, vector<8x2xf32> -> vector<8x2xf32>
    %c0_15 = arith.constant 0 : index
    %c0_16 = arith.constant 0 : index
    %17 = vector.load %arg7[%c0_15, %c0_16] : memref<1x2xf32, #tpu.memory_space<vmem>>, vector<1x2xf32>
    %18 = vector.broadcast %17 : vector<1x2xf32> to vector<8x2xf32>
    %19 = arith.addf %16, %18 : vector<8x2xf32>
    %c0_17 = arith.constant 0 : index
    %c0_18 = arith.constant 0 : index
    %20 = vector.load %arg8[%c0_17, %c0_18] : memref<8x2xf32, #tpu.memory_space<vmem>>, vector<8x2xf32>
    tpu.vector_store %arg8[%c0_17, %c0_18], %19 {strides = array<i32>} : memref<8x2xf32, #tpu.memory_space<vmem>>, vector<8x2xf32>,
    return
  }
  func.func @transform_0(%arg0: i32) -> (i32, i32) {
    %c0_i32 = arith.constant 0 : i32
    %c0_i32_0 = arith.constant 0 : i32
    return %arg0, %c0_i32 : i32, i32
  }
  func.func @transform_1(%arg0: i32) -> (i32, i32) {
    %c0_i32 = arith.constant 0 : i32
    %c0_i32_0 = arith.constant 0 : i32
    %c0_i32_1 = arith.constant 0 : i32
    return %c0_i32, %c0_i32_0 : i32, i32
  }
  func.func @transform_2(%arg0: i32) -> (i32, i32) {
    %c0_i32 = arith.constant 0 : i32
    %c0_i32_0 = arith.constant 0 : i32
    %c0_i32_1 = arith.constant 0 : i32
    return %c0_i32, %c0_i32_0 : i32, i32
  }
  func.func @transform_3(%arg0: i32) -> (i32, i32) {
    %c0_i32 = arith.constant 0 : i32
    %c0_i32_0 = arith.constant 0 : i32
    %c0_i32_1 = arith.constant 0 : i32
    return %c0_i32, %c0_i32_0 : i32, i32
  }
  func.func @transform_4(%arg0: i32) -> (i32, i32) {
    %c0_i32 = arith.constant 0 : i32
    %c0_i32_0 = arith.constant 0 : i32
    %c0_i32_1 = arith.constant 0 : i32
    return %c0_i32, %c0_i32_0 : i32, i32
  }
  func.func @transform_5(%arg0: i32) -> (i32, i32) {
    %c0_i32 = arith.constant 0 : i32
    %c0_i32_0 = arith.constant 0 : i32
    %c0_i32_1 = arith.constant 0 : i32
    return %c0_i32, %c0_i32_0 : i32, i32
  }
  func.func @transform_6(%arg0: i32) -> (i32, i32) {
    %c0_i32 = arith.constant 0 : i32
    %c0_i32_0 = arith.constant 0 : i32
    %c0_i32_1 = arith.constant 0 : i32
    return %c0_i32, %c0_i32_0 : i32, i32
  }
  func.func @transform_7(%arg0: i32) -> (i32, i32) {
    %c0_i32 = arith.constant 0 : i32
    %c0_i32_0 = arith.constant 0 : i32
    return %arg0, %c0_i32 : i32, i32
  }
}

</mosaic_0001>

<llo_original>
// kernel: imitation_net_forward.1
$region0: #{imitation_net_forward.1}
  #allocation0 [shape = 'u32[]', space=smem, size = 0x4, offset = 0x4, fixed_abs, tag = 'smem constant byte address 0x4 - core index']
  #allocation1 [shape = 'u32[144,128]{1,0:T(1,128)}', space=vmem, size = 0x12000, scoped, tag = 'internal scratch']
  %s0 = inlined_call_operand.vmem [shape: f32[7,4], index: 0, kind: input, shape index: {}]
  %s1 = inlined_call_operand.vmem [shape: f32[4,64], index: 1, kind: input, shape index: {}]
  %s2 = inlined_call_operand.vmem [shape: f32[1,64], index: 2, kind: input, shape index: {}]
  %s3 = inlined_call_operand.vmem [shape: f32[64,64], index: 3, kind: input, shape index: {}]
  %s4 = inlined_call_operand.vmem [shape: f32[1,64], index: 4, kind: input, shape index: {}]
  %s5 = inlined_call_operand.vmem [shape: f32[64,2], index: 5, kind: input, shape index: {}]
  %s6 = inlined_call_operand.vmem [shape: f32[1,2], index: 6, kind: input, shape index: {}]
  %s7 = inlined_call_operand.vmem [shape: f32[7,2], index: 7, kind: output, shape index: {}]
  %s8 = sld [smem:[#allocation0]]
  $region38: #{imitation_net_forward.1} parent=0
    _
  %s10 = ssub.s32 1, %s8
  %s11 = scalar_select 0, %s10, %s8
  // Predicated region
  $region2: #{imitation_net_forward.1} parent=0 // pred_check
    _
  $region3: #{imitation_net_forward.1} parent=0 // pred_check_branch
    %13 = sbr.rel (0) target = $region5
  $region4: #{imitation_net_forward.1} parent=0 // pred_region
    _
  $region5: #{imitation_net_forward.1} parent=0 // pred_fallthru
    _
  // Predicated region
  $region6: #{imitation_net_forward.1} parent=0 // pred_check
    _
  $region7: #{imitation_net_forward.1} parent=0 // pred_check_branch
    %15 = sbr.rel (0) target = $region9
  $region8: #{imitation_net_forward.1} parent=0 // pred_region
    _
  $region9: #{imitation_net_forward.1} parent=0 // pred_fallthru
    _
  // Predicated region
  $region10: #{imitation_net_forward.1} parent=0 // pred_check
    _
  $region11: #{imitation_net_forward.1} parent=0 // pred_check_branch
    %17 = sbr.rel (0) target = $region13
  $region12: #{imitation_net_forward.1} parent=0 // pred_region
    _
  $region13: #{imitation_net_forward.1} parent=0 // pred_fallthru
    _
  // Predicated region
  $region14: #{imitation_net_forward.1} parent=0 // pred_check
    _
  $region15: #{imitation_net_forward.1} parent=0 // pred_check_branch
    %19 = sbr.rel (0) target = $region17
  $region16: #{imitation_net_forward.1} parent=0 // pred_region
    _
  $region17: #{imitation_net_forward.1} parent=0 // pred_fallthru
    _
  // Predicated region
  $region18: #{imitation_net_forward.1} parent=0 // pred_check
    _
  $region19: #{imitation_net_forward.1} parent=0 // pred_check_branch
    %21 = sbr.rel (0) target = $region21
  $region20: #{imitation_net_forward.1} parent=0 // pred_region
    _
  $region21: #{imitation_net_forward.1} parent=0 // pred_fallthru
    _
  // Predicated region
  $region22: #{imitation_net_forward.1} parent=0 // pred_check
    _
  $region23: #{imitation_net_forward.1} parent=0 // pred_check_branch
    %23 = sbr.rel (0) target = $region25
  $region24: #{imitation_net_forward.1} parent=0 // pred_region
    _
  $region25: #{imitation_net_forward.1} parent=0 // pred_fallthru
    _
  // Predicated region
  $region26: #{imitation_net_forward.1} parent=0 // pred_check
    _
  $region27: #{imitation_net_forward.1} parent=0 // pred_check_branch
    %25 = sbr.rel (0) target = $region29
  $region28: #{imitation_net_forward.1} parent=0 // pred_region
    _
  $region29: #{imitation_net_forward.1} parent=0 // pred_fallthru
    _
  %v26 = vld [vmem:[%s0] sm:$0xff]
  %v27 = vld [vmem:[%s1] sm:$0xf]
  %v28 = vld [vmem:[%s2] sm:$0x1]
  %v30 = vlaneseq
  %v31 = vshrl.u32 %v30, 7
  %v32 = vsub.s32 0, %v31
  %v33 = vrot.slane %v28, %v32
  %vm35 = vcmask 31744
  %v37 = vsel %vm35, %v26, 0
  %vm39 = vcmask 1043456
  %v41 = vsel %vm39, %v27, 0
  %43 = vmatprep.subr.mxu0 0.0
  %44 = vmatpush1.msra.mxu0 %v41
  %45 = vmatprep.subr.mxu0 0.0
  %46 = vmatpush1.msra.mxu0 0.0
  %47 = vmatprep.subr.mxu0 0.0
  %48 = vmatpush1.msra.mxu0 0.0
  %49 = vmatprep.subr.mxu0 0.0
  %50 = vmatpush1.msra.mxu0 0.0
  %51 = vmatprep.subr.mxu0 0.0
  %52 = vmatpush1.msra.mxu0 0.0
  %53 = vmatprep.subr.mxu0 0.0
  %54 = vmatpush1.msra.mxu0 0.0
  %55 = vmatprep.subr.mxu0 0.0
  %56 = vmatpush1.msra.mxu0 0.0
  %57 = vmatprep.subr.mxu0 0.0
  %58 = vmatpush1.msra.mxu0 0.0
  %59 = vmatprep.subr.mxu0 0.0
  %60 = vmatpush1.msra.mxu0 0.0
  %61 = vmatprep.subr.mxu0 0.0
  %62 = vmatpush1.msra.mxu0 0.0
  %63 = vmatprep.subr.mxu0 0.0
  %64 = vmatpush1.msra.mxu0 0.0
  %65 = vmatprep.subr.mxu0 0.0
  %66 = vmatpush1.msra.mxu0 0.0
  %67 = vmatprep.subr.mxu0 0.0
  %68 = vmatpush1.msra.mxu0 0.0
  %69 = vmatprep.subr.mxu0 0.0
  %70 = vmatpush1.msra.mxu0 0.0
  %71 = vmatprep.subr.mxu0 0.0
  %72 = vmatpush1.msra.mxu0 0.0
  %73 = vmatprep.subr.mxu0 0.0
  %74 = vmatpush1.msra.mxu0 0.0
  %75 = vmatprep.subr.mxu0 0.0
  %76 = vmatpush1.msra.mxu0 0.0
  %77 = vmatprep.subr.mxu0 0.0
  %78 = vmatpush1.msra.mxu0 0.0
  %79 = vmatprep.subr.mxu0 0.0
  %80 = vmatpush1.msra.mxu0 0.0
  %81 = vmatprep.subr.mxu0 0.0
  %82 = vmatpush1.msra.mxu0 0.0
  %83 = vmatprep.subr.mxu0 0.0
  %84 = vmatpush1.msra.mxu0 0.0
  %85 = vmatprep.subr.mxu0 0.0
  %86 = vmatpush1.msra.mxu0 0.0
  %87 = vmatprep.subr.mxu0 0.0
  %88 = vmatpush1.msra.mxu0 0.0
  %89 = vmatprep.subr.mxu0 0.0
  %90 = vmatpush1.msra.mxu0 0.0
  %91 = vmatprep.subr.mxu0 0.0
  %92 = vmatpush1.msra.mxu0 0.0
  %93 = vmatprep.subr.mxu0 0.0
  %94 = vmatpush1.msra.mxu0 0.0
  %95 = vmatprep.subr.mxu0 0.0
  %96 = vmatpush1.msra.mxu0 0.0
  %97 = vmatprep.subr.mxu0 0.0
  %98 = vmatpush1.msra.mxu0 0.0
  %99 = vmatprep.subr.mxu0 0.0
  %100 = vmatpush1.msra.mxu0 0.0
  %101 = vmatprep.subr.mxu0 0.0
  %102 = vmatpush1.msra.mxu0 0.0
  %103 = vmatprep.subr.mxu0 0.0
  %104 = vmatpush1.msra.mxu0 0.0
  %105 = vmatprep.subr.mxu0 0.0
  %106 = vmatpush1.msra.mxu0 0.0
  %107 = vmatprep.mubr.f32.mxu0 0.0
  %108 = vmatmul.mubr.f32.gmra.mrb[0].mxu0 %v37
  %v109 = vpop.f32.mrb[0].mxu0
  %v110 = vadd.f32 %v33, %v109
  %v111 = vpop.f32.mrb[0].mxu0
  %112 = vdwg.mxu0
  %v113 = vmax.f32 %v110, 0.0
  %v114 = vld [vmem:[%s3] sm:$0xff]
  %v115 = vld [vmem:[%s3 + $0x8] sm:$0xff]
  %v116 = vld [vmem:[%s3 + $0x10] sm:$0xff]
  %v117 = vld [vmem:[%s3 + $0x18] sm:$0xff]
  %v118 = vld [vmem:[%s3 + $0x20] sm:$0xff]
  %v119 = vld [vmem:[%s3 + $0x28] sm:$0xff]
  %v120 = vld [vmem:[%s3 + $0x30] sm:$0xff]
  %v121 = vld [vmem:[%s3 + $0x38] sm:$0xff]
  %v122 = vld [vmem:[%s4] sm:$0x1]
  %v124 = vlaneseq
  %v125 = vshrl.u32 %v124, 7
  %v126 = vsub.s32 0, %v125
  %v127 = vrot.slane %v122, %v126
  %vm129 = vcmask 523264
  %v131 = vsel %vm129, %v113, 0
  %133 = vmatprep.subr.mxu0 0.0
  %134 = vmatpush1.msra.mxu0 %v114
  %135 = vmatprep.subr.mxu0 0.0
  %136 = vmatpush1.msra.mxu0 %v115
  %137 = vmatprep.subr.mxu0 0.0
  %138 = vmatpush1.msra.mxu0 %v116
  %139 = vmatprep.subr.mxu0 0.0
  %140 = vmatpush1.msra.mxu0 %v117
  %141 = vmatprep.subr.mxu0 0.0
  %142 = vmatpush1.msra.mxu0 %v118
  %143 = vmatprep.subr.mxu0 0.0
  %144 = vmatpush1.msra.mxu0 %v119
  %145 = vmatprep.subr.mxu0 0.0
  %146 = vmatpush1.msra.mxu0 %v120
  %147 = vmatprep.subr.mxu0 0.0
  %148 = vmatpush1.msra.mxu0 %v121
  %149 = vmatprep.subr.mxu0 0.0
  %150 = vmatpush1.msra.mxu0 0.0
  %151 = vmatprep.subr.mxu0 0.0
  %152 = vmatpush1.msra.mxu0 0.0
  %153 = vmatprep.subr.mxu0 0.0
  %154 = vmatpush1.msra.mxu0 0.0
  %155 = vmatprep.subr.mxu0 0.0
  %156 = vmatpush1.msra.mxu0 0.0
  %157 = vmatprep.subr.mxu0 0.0
  %158 = vmatpush1.msra.mxu0 0.0
  %159 = vmatprep.subr.mxu0 0.0
  %160 = vmatpush1.msra.mxu0 0.0
  %161 = vmatprep.subr.mxu0 0.0
  %162 = vmatpush1.msra.mxu0 0.0
  %163 = vmatprep.subr.mxu0 0.0
  %164 = vmatpush1.msra.mxu0 0.0
  %165 = vmatprep.subr.mxu0 0.0
  %166 = vmatpush1.msra.mxu0 0.0
  %167 = vmatprep.subr.mxu0 0.0
  %168 = vmatpush1.msra.mxu0 0.0
  %169 = vmatprep.subr.mxu0 0.0
  %170 = vmatpush1.msra.mxu0 0.0
  %171 = vmatprep.subr.mxu0 0.0
  %172 = vmatpush1.msra.mxu0 0.0
  %173 = vmatprep.subr.mxu0 0.0
  %174 = vmatpush1.msra.mxu0 0.0
  %175 = vmatprep.subr.mxu0 0.0
  %176 = vmatpush1.msra.mxu0 0.0
  %177 = vmatprep.subr.mxu0 0.0
  %178 = vmatpush1.msra.mxu0 0.0
  %179 = vmatprep.subr.mxu0 0.0
  %180 = vmatpush1.msra.mxu0 0.0
  %181 = vmatprep.subr.mxu0 0.0
  %182 = vmatpush1.msra.mxu0 0.0
  %183 = vmatprep.subr.mxu0 0.0
  %184 = vmatpush1.msra.mxu0 0.0
  %185 = vmatprep.subr.mxu0 0.0
  %186 = vmatpush1.msra.mxu0 0.0
  %187 = vmatprep.subr.mxu0 0.0
  %188 = vmatpush1.msra.mxu0 0.0
  %189 = vmatprep.subr.mxu0 0.0
  %190 = vmatpush1.msra.mxu0 0.0
  %191 = vmatprep.subr.mxu0 0.0
  %192 = vmatpush1.msra.mxu0 0.0
  %193 = vmatprep.subr.mxu0 0.0
  %194 = vmatpush1.msra.mxu0 0.0
  %195 = vmatprep.subr.mxu0 0.0
  %196 = vmatpush1.msra.mxu0 0.0
  %197 = vmatprep.mubr.f32.mxu0 0.0
  %198 = vmatmul.mubr.f32.gmra.mrb[0].mxu0 %v131
  %v199 = vpop.f32.mrb[0].mxu0
  %v200 = vadd.f32 %v127, %v199
  %v201 = vpop.f32.mrb[0].mxu0
  %202 = vdwg.mxu0
  %v203 = vmax.f32 %v200, 0.0
  %v204 = vld [vmem:[%s5] sm:$0xff]
  %v205 = vld [vmem:[%s5 + $0x8] sm:$0xff]
  %v206 = vld [vmem:[%s5 + $0x10] sm:$0xff]
  %v207 = vld [vmem:[%s5 + $0x18] sm:$0xff]
  %v208 = vld [vmem:[%s5 + $0x20] sm:$0xff]
  %v209 = vld [vmem:[%s5 + $0x28] sm:$0xff]
  %v210 = vld [vmem:[%s5 + $0x30] sm:$0xff]
  %v211 = vld [vmem:[%s5 + $0x38] sm:$0xff]
  %v212 = vld [vmem:[%s6] sm:$0x1]
  %v214 = vlaneseq
  %v215 = vshrl.u32 %v214, 7
  %v216 = vsub.s32 0, %v215
  %v217 = vrot.slane %v212, %v216
  %v220 = vsel %vm129, %v203, 0
  %222 = vmatprep.subr.mxu0 0.0
  %223 = vmatpush1.msra.mxu0 %v204
  %224 = vmatprep.subr.mxu0 0.0
  %225 = vmatpush1.msra.mxu0 %v205
  %226 = vmatprep.subr.mxu0 0.0
  %227 = vmatpush1.msra.mxu0 %v206
  %228 = vmatprep.subr.mxu0 0.0
  %229 = vmatpush1.msra.mxu0 %v207
  %230 = vmatprep.subr.mxu0 0.0
  %231 = vmatpush1.msra.mxu0 %v208
  %232 = vmatprep.subr.mxu0 0.0
  %233 = vmatpush1.msra.mxu0 %v209
  %234 = vmatprep.subr.mxu0 0.0
  %235 = vmatpush1.msra.mxu0 %v210
  %236 = vmatprep.subr.mxu0 0.0
  %237 = vmatpush1.msra.mxu0 %v211
  %238 = vmatprep.subr.mxu0 0.0
  %239 = vmatpush1.msra.mxu0 0.0
  %240 = vmatprep.subr.mxu0 0.0
  %241 = vmatpush1.msra.mxu0 0.0
  %242 = vmatprep.subr.mxu0 0.0
  %243 = vmatpush1.msra.mxu0 0.0
  %244 = vmatprep.subr.mxu0 0.0
  %245 = vmatpush1.msra.mxu0 0.0
  %246 = vmatprep.subr.mxu0 0.0
  %247 = vmatpush1.msra.mxu0 0.0
  %248 = vmatprep.subr.mxu0 0.0
  %249 = vmatpush1.msra.mxu0 0.0
  %250 = vmatprep.subr.mxu0 0.0
  %251 = vmatpush1.msra.mxu0 0.0
  %252 = vmatprep.subr.mxu0 0.0
  %253 = vmatpush1.msra.mxu0 0.0
  %254 = vmatprep.subr.mxu0 0.0
  %255 = vmatpush1.msra.mxu0 0.0
  %256 = vmatprep.subr.mxu0 0.0
  %257 = vmatpush1.msra.mxu0 0.0
  %258 = vmatprep.subr.mxu0 0.0
  %259 = vmatpush1.msra.mxu0 0.0
  %260 = vmatprep.subr.mxu0 0.0
  %261 = vmatpush1.msra.mxu0 0.0
  %262 = vmatprep.subr.mxu0 0.0
  %263 = vmatpush1.msra.mxu0 0.0
  %264 = vmatprep.subr.mxu0 0.0
  %265 = vmatpush1.msra.mxu0 0.0
  %266 = vmatprep.subr.mxu0 0.0
  %267 = vmatpush1.msra.mxu0 0.0
  %268 = vmatprep.subr.mxu0 0.0
  %269 = vmatpush1.msra.mxu0 0.0
  %270 = vmatprep.subr.mxu0 0.0
  %271 = vmatpush1.msra.mxu0 0.0
  %272 = vmatprep.subr.mxu0 0.0
  %273 = vmatpush1.msra.mxu0 0.0
  %274 = vmatprep.subr.mxu0 0.0
  %275 = vmatpush1.msra.mxu0 0.0
  %276 = vmatprep.subr.mxu0 0.0
  %277 = vmatpush1.msra.mxu0 0.0
  %278 = vmatprep.subr.mxu0 0.0
  %279 = vmatpush1.msra.mxu0 0.0
  %280 = vmatprep.subr.mxu0 0.0
  %281 = vmatpush1.msra.mxu0 0.0
  %282 = vmatprep.subr.mxu0 0.0
  %283 = vmatpush1.msra.mxu0 0.0
  %284 = vmatprep.subr.mxu0 0.0
  %285 = vmatpush1.msra.mxu0 0.0
  %286 = vmatprep.mubr.f32.mxu0 0.0
  %287 = vmatmul.mubr.f32.gmra.mrb[0].mxu0 %v220
  %v288 = vpop.f32.mrb[0].mxu0
  %v289 = vadd.f32 %v217, %v288
  %v290 = vpop.f32.mrb[0].mxu0
  %291 = vdwg.mxu0
  %vm292 = vcmask 15360
  %293 = vst.msk [vmem:[%s7] sm:$0xff] %vm292, %v289
  // Predicated region
  $region30: #{imitation_net_forward.1} parent=0 // pred_check
    _
  $region31: #{imitation_net_forward.1} parent=0 // pred_check_branch
    %295 = sbr.rel (0) target = $region33
  $region32: #{imitation_net_forward.1} parent=0 // pred_region
    _
  $region33: #{imitation_net_forward.1} parent=0 // pred_fallthru
    _
  // Predicated region
  $region34: #{imitation_net_forward.1} parent=0 // pred_check
    _
  $region35: #{imitation_net_forward.1} parent=0 // pred_check_branch
    %297 = sbr.rel (0) target = $region37
  $region36: #{imitation_net_forward.1} parent=0 // pred_region
    _
  $region37: #{imitation_net_forward.1} parent=0 // pred_fallthru
    _

</llo_original>
